<compile_context>
chip_gen: v7x
topology: tpu7x:2x2x1
jax: 0.10.0
libtpu: 0.0.40
codegen_flags: <defaults>
</compile_context>

<pallas_src>
import jax
import jax.numpy as jnp
from jax import lax
from jax.experimental import pallas as pl
from jax.experimental.pallas import tpu as pltpu


def _onehot_gather_kernel(idx_ref, x_ref, o_ref):
    """out[b, t, :] = x[b, idx[b, t, 0], :] via an exact one-hot matmul (MXU)."""
    bt, remain_T, _ = idx_ref.shape
    T = x_ref.shape[1]
    idx = idx_ref[...]                                         # (bt, remain_T, 1) int32
    src = lax.broadcasted_iota(jnp.int32, (bt, remain_T, T), 2)
    onehot = (src == idx).astype(x_ref.dtype)                  # exact 0/1 selection rows
    out = jnp.einsum("btk,bkc->btc", onehot, x_ref[...],
                     preferred_element_type=jnp.float32)
    o_ref[...] = out.astype(o_ref.dtype)


def patch_shuffle_gather(patches_btc, fwd_bt, remain_T, *, max_block_bytes=8 << 20):
    """Pallas gather: out[b, t, :] = patches_btc[b, fwd_bt[b, t], :] for t < remain_T."""
    B, T, C = patches_btc.shape
    itemsize = patches_btc.dtype.itemsize
    # Cap the per-step batch tile so bt*T*C (double-buffered by the pipeline)
    # stays well inside VMEM even on v7x (64 MiB physical / 32 MiB scoped).
    bt = max(1, min(B, max_block_bytes // max(1, T * C * itemsize)))
    while B % bt:  # keep blocks full (B is small; this loop is trivial)
        bt -= 1

    idx = fwd_bt[:, :remain_T].astype(jnp.int32)[..., None]    # (B, remain_T, 1)

    grid_spec = pltpu.PrefetchScalarGridSpec(
        num_scalar_prefetch=0,
        grid=(B // bt,),
        in_specs=[
            pl.BlockSpec((bt, remain_T, 1), lambda i: (i, 0, 0)),   # indexes (tiny)
            pl.BlockSpec((bt, T, C), lambda i: (i, 0, 0)),          # patch tile
        ],
        out_specs=pl.BlockSpec((bt, remain_T, C), lambda i: (i, 0, 0)),
    )
    return pl.pallas_call(
        _onehot_gather_kernel,
        out_shape=jax.ShapeDtypeStruct((B, remain_T, C), patches_btc.dtype),
        grid_spec=grid_spec,
        compiler_params=pltpu.CompilerParams(
            dimension_semantics=("parallel",)),
    )(idx, patches_btc)


def patch_shuffle(patches, ratio, key):
    """PatchShuffle.forward: (shuffled_patches, forward_indexes, backward_indexes)."""
    T, B, C = patches.shape
    # rounded, not truncated, to avoid float-epsilon surprises (e.g. 0.999.. -> short)
    remain_T = int(round(T * (1 - ratio)))

    # One independent random permutation of [0, T) per batch column.
    # (numpy shuffle on host in the original module; done with jax.random here.)
    keys = jax.random.split(key, B)
    fwd_bt = jax.vmap(lambda k: jax.random.permutation(k, T))(keys).astype(jnp.int32)  # (B, T)
    forward_indexes = fwd_bt.T                                                          # (T, B)
    backward_indexes = jnp.argsort(forward_indexes, axis=0).astype(jnp.int32)           # (T, B)
    # note: torch uses int64 ("long") indexes; int32 is used here for TPU friendliness.

    # Batch-first layout for the kernel: sublanes <- T, lanes <- C.
    patches_btc = jnp.transpose(patches, (1, 0, 2))             # (B, T, C)
    shuffled_btc = patch_shuffle_gather(patches_btc, fwd_bt, remain_T)
    shuffled = jnp.transpose(shuffled_btc, (1, 0, 2))           # (remain_T, B, C)
    return shuffled, forward_indexes, backward_indexes


if __name__ == "__main__":
    key = jax.random.PRNGKey(0)
    k_data, k_perm = jax.random.split(key)

    T, B, C = 16, 2, 128   # C multiple of 128 -> lane-dense, unmasked output stores
    ratio = 0.5            # remain_T = 8
    patches = jax.random.normal(k_data, (T, B, C), dtype=jnp.float32)

    out, fwd, bwd = patch_shuffle(patches, ratio, k_perm)
    out = jax.block_until_ready(out)

    # reference check (plain JAX gather; same semantics as torch.gather along dim 0)
    remain_T = int(round(T * (1 - ratio)))
    ref = jnp.take_along_axis(
        patches, jnp.broadcast_to(fwd[:, :, None], (T, B, C)).astype(jnp.int32), axis=0
    )[:remain_T]
    assert out.shape == (remain_T, B, C)
    assert jnp.allclose(out, ref), "pallas one-hot gather mismatch vs reference"
    # backward_indexes really inverts forward_indexes
    assert jnp.all(jnp.take_along_axis(fwd, bwd, axis=0) == jnp.arange(T)[:, None])

    print("KERNEL_OK")
</pallas_src>

<mosaic_0001>
module attributes {stable_mosaic.version = 11 : i64} {
  func.func @_onehot_gather_kernel(%arg0: i32, %arg1: memref<2x8x1xi32, #tpu.memory_space<vmem>>, %arg2: memref<2x16x128xf32, #tpu.memory_space<vmem>>, %arg3: memref<2x8x128xf32, #tpu.memory_space<vmem>>) attributes {dimension_semantics = [#tpu.dimension_semantics<parallel>], iteration_bounds = array<i64: 1>, scalar_prefetch = 0 : i64, scratch_operands = 0 : i64, tpu.core_type = #tpu.core_type<tc>, window_params = [{transform_indices = @transform_0, window_bounds = array<i64: 2, 8, 1>}, {transform_indices = @transform_1, window_bounds = array<i64: 2, 16, 128>}, {transform_indices = @transform_2, window_bounds = array<i64: 2, 8, 128>}]} {
    %c0 = arith.constant 0 : index
    %c0_0 = arith.constant 0 : index
    %c0_1 = arith.constant 0 : index
    %0 = vector.load %arg1[%c0, %c0_0, %c0_1] : memref<2x8x1xi32, #tpu.memory_space<vmem>>, vector<2x8x1xi32>
    %1 = tpu.iota {dimensions = array<i32: 2>} : vector<2x8x16xi32>
    %2 = vector.broadcast %0 : vector<2x8x1xi32> to vector<2x8x16xi32>
    %3 = arith.cmpi eq, %1, %2 : vector<2x8x16xi32>
    %4 = arith.extui %3 : vector<2x8x16xi1> to vector<2x8x16xi32>
    %5 = arith.sitofp %4 : vector<2x8x16xi32> to vector<2x8x16xf32>
    %c0_2 = arith.constant 0 : index
    %c0_3 = arith.constant 0 : index
    %c0_4 = arith.constant 0 : index
    %6 = vector.load %arg2[%c0_2, %c0_3, %c0_4] : memref<2x16x128xf32, #tpu.memory_space<vmem>>, vector<2x16x128xf32>
    "tpu.trace_start"() <{level = 10 : i32, message = "btk,bkc->btc"}> : () -> ()
    %cst = arith.constant dense<0.000000e+00> : vector<2x8x128xf32>
    %7 = tpu.matmul %5, %6, %cst {dimension_numbers = #tpu.dot_dimension_numbers<[2], [1], [1], [2], [0, 0, 0, 1, 1, 2], [0], [0]>} : vector<2x8x16xf32>, vector<2x16x128xf32>, vector<2x8x128xf32> -> vector<2x8x128xf32>
    "tpu.trace_stop"() : () -> ()
    %c0_5 = arith.constant 0 : index
    %c0_6 = arith.constant 0 : index
    %c0_7 = arith.constant 0 : index
    %8 = vector.load %arg3[%c0_5, %c0_6, %c0_7] : memref<2x8x128xf32, #tpu.memory_space<vmem>>, vector<2x8x128xf32>
    tpu.vector_store %arg3[%c0_5, %c0_6, %c0_7], %7 {strides = array<i32>} : memref<2x8x128xf32, #tpu.memory_space<vmem>>, vector<2x8x128xf32>,
    return
  }
  func.func @transform_0(%arg0: i32) -> (i32, i32, i32) {
    %c0_i32 = arith.constant 0 : i32
    %c0_i32_0 = arith.constant 0 : i32
    %c0_i32_1 = arith.constant 0 : i32
    return %arg0, %c0_i32, %c0_i32_0 : i32, i32, i32
  }
  func.func @transform_1(%arg0: i32) -> (i32, i32, i32) {
    %c0_i32 = arith.constant 0 : i32
    %c0_i32_0 = arith.constant 0 : i32
    %c0_i32_1 = arith.constant 0 : i32
    return %arg0, %c0_i32, %c0_i32_0 : i32, i32, i32
  }
  func.func @transform_2(%arg0: i32) -> (i32, i32, i32) {
    %c0_i32 = arith.constant 0 : i32
    %c0_i32_0 = arith.constant 0 : i32
    %c0_i32_1 = arith.constant 0 : i32
    return %arg0, %c0_i32, %c0_i32_0 : i32, i32, i32
  }
}

</mosaic_0001>

<llo_original>
// kernel: tpu_custom_call.1
$region0: #{tpu_custom_call.1}
  #allocation0 [shape = 'u32[]', space=smem, size = 0x4, offset = 0x4, fixed_abs, tag = 'smem constant byte address 0x4 - core index']
  #allocation1 [shape = 'u32[144,128]{1,0:T(1,128)}', space=vmem, size = 0x12000, scoped, tag = 'internal scratch']
  %s0 = inlined_call_operand.vmem [shape: s32[2,8,1], index: 0, kind: input, shape index: {}]
  %s1 = inlined_call_operand.hbm [shape: f32[2,16,128], index: 1, kind: input, shape index: {}]
  %s2 = inlined_call_operand.hbm [shape: f32[2,8,128], index: 2, kind: output, shape index: {}]
  %s3 = sld [smem:[#allocation0]]
  $region22: #{tpu_custom_call.1} parent=0
    _
  %s5 = ssub.s32 1, %s3
  %s6 = scalar_select 0, %s5, %s3
  $region1: #{tpu_custom_call.1} parent=0
    #allocation2 [shape = 'u8[16384]{0}', space=vmem, size = 0x4000, scoped, tag = 'input window, operand 1, single buffered']
    #allocation3 [shape = 's32[1]{0}', space=sflag, size = 0x4, scoped, tag = 'scoped memory for tpu_custom_call.1']
    #allocation4 [shape = 's32[1]{0}', space=sflag, size = 0x4, scoped, tag = 'scoped memory for tpu_custom_call.1']
    #allocation5 [shape = 'u8[8192]{0}', space=vmem, size = 0x2000, scoped, tag = 'output window, operand 0, single buffered']
    %7 = vsyncpa [#allocation3], 0
    %8 = vsyncpa [#allocation4], 0
    // Predicated region
    $region2: #{tpu_custom_call.1} parent=1 // pred_check
      _
    $region3: #{tpu_custom_call.1} parent=1 // pred_check_branch
      %10 = sbr.rel (0) target = $region5
    $region4: #{tpu_custom_call.1} parent=1 // pred_region
      _
    $region5: #{tpu_custom_call.1} parent=1 // pred_fallthru
      _
    // Predicated region
    $region6: #{tpu_custom_call.1} parent=1 // pred_check
      _
    $region7: #{tpu_custom_call.1} parent=1 // pred_check_branch
      %12 = sbr.rel (0) target = $region9
    $region8: #{tpu_custom_call.1} parent=1 // pred_region
      %s14 = ssub.s32 512, 512
      %15 = vsyncadd [#allocation3], %s14
      %s16 = sshll.u32 [#allocation2], 4
      %s17 = int_to_ptr.vmem [resolvable:$true] %s16
      %22 = dma.hbm_to_vmem [thread:$0]  %s1, 512, %s17, [#allocation3], 128, 128, 8
    $region9: #{tpu_custom_call.1} parent=1 // pred_fallthru
      _
    // Predicated region
    $region10: #{tpu_custom_call.1} parent=1 // pred_check
      _
    $region11: #{tpu_custom_call.1} parent=1 // pred_check_branch
      %24 = sbr.rel (0) target = $region13
    $region12: #{tpu_custom_call.1} parent=1 // pred_region
      %25 = dma.done [#allocation3], 512
    $region13: #{tpu_custom_call.1} parent=1 // pred_fallthru
      _
    %v26 = vld [vmem:[%s0] sm:$0xff]
    %v27 = vld [vmem:[%s0 + $0x8] sm:$0xff]
    %v28 = vlaneseq
    %v29 = vand.u32 %v28, 127
    %30 = vset.pattern.permute.xlu0 0
    %31 = vperm.xlu0 %30, %v26
    %v32 = vpop.permute.xlu0 %31
    %33 = vset.pattern.permute.xlu0 0
    %34 = vperm.xlu0 %33, %v27
    %v35 = vpop.permute.xlu0 %34
    %vm36 = vcmp.eq.s32.totalorder %v29, %v32
    %vm37 = vcmp.eq.s32.totalorder %v29, %v35
    %v38 = vsel %vm36, 1, 0
    %v39 = vsel %vm37, 1, 0
    %v40 = vcvt.s32.f32 %v38
    %v41 = vcvt.s32.f32 %v39
    %v42 = vld [vmem:[#allocation2] sm:$0xff]
    %v43 = vld [vmem:[#allocation2 + $0x8] sm:$0xff]
    %v44 = vld [vmem:[#allocation2 + $0x10] sm:$0xff]
    %v45 = vld [vmem:[#allocation2 + $0x18] sm:$0xff]
    %vm46 = vcmask 130048
    %v48 = vsel %vm46, %v40, 0
    %50 = vmatprep.subr.mxu0 0.0
    %51 = vmatpush1.msra.mxu0 %v42
    %52 = vmatprep.subr.mxu0 0.0
    %53 = vmatpush1.msra.mxu0 %v43
    %54 = vmatprep.subr.mxu0 0.0
    %55 = vmatpush1.msra.mxu0 0.0
    %56 = vmatprep.subr.mxu0 0.0
    %57 = vmatpush1.msra.mxu0 0.0
    %58 = vmatprep.subr.mxu0 0.0
    %59 = vmatpush1.msra.mxu0 0.0
    %60 = vmatprep.subr.mxu0 0.0
    %61 = vmatpush1.msra.mxu0 0.0
    %62 = vmatprep.subr.mxu0 0.0
    %63 = vmatpush1.msra.mxu0 0.0
    %64 = vmatprep.subr.mxu0 0.0
    %65 = vmatpush1.msra.mxu0 0.0
    %66 = vmatprep.subr.mxu0 0.0
    %67 = vmatpush1.msra.mxu0 0.0
    %68 = vmatprep.subr.mxu0 0.0
    %69 = vmatpush1.msra.mxu0 0.0
    %70 = vmatprep.subr.mxu0 0.0
    %71 = vmatpush1.msra.mxu0 0.0
    %72 = vmatprep.subr.mxu0 0.0
    %73 = vmatpush1.msra.mxu0 0.0
    %74 = vmatprep.subr.mxu0 0.0
    %75 = vmatpush1.msra.mxu0 0.0
    %76 = vmatprep.subr.mxu0 0.0
    %77 = vmatpush1.msra.mxu0 0.0
    %78 = vmatprep.subr.mxu0 0.0
    %79 = vmatpush1.msra.mxu0 0.0
    %80 = vmatprep.subr.mxu0 0.0
    %81 = vmatpush1.msra.mxu0 0.0
    %82 = vmatprep.subr.mxu0 0.0
    %83 = vmatpush1.msra.mxu0 0.0
    %84 = vmatprep.subr.mxu0 0.0
    %85 = vmatpush1.msra.mxu0 0.0
    %86 = vmatprep.subr.mxu0 0.0
    %87 = vmatpush1.msra.mxu0 0.0
    %88 = vmatprep.subr.mxu0 0.0
    %89 = vmatpush1.msra.mxu0 0.0
    %90 = vmatprep.subr.mxu0 0.0
    %91 = vmatpush1.msra.mxu0 0.0
    %92 = vmatprep.subr.mxu0 0.0
    %93 = vmatpush1.msra.mxu0 0.0
    %94 = vmatprep.subr.mxu0 0.0
    %95 = vmatpush1.msra.mxu0 0.0
    %96 = vmatprep.subr.mxu0 0.0
    %97 = vmatpush1.msra.mxu0 0.0
    %98 = vmatprep.subr.mxu0 0.0
    %99 = vmatpush1.msra.mxu0 0.0
    %100 = vmatprep.subr.mxu0 0.0
    %101 = vmatpush1.msra.mxu0 0.0
    %102 = vmatprep.subr.mxu0 0.0
    %103 = vmatpush1.msra.mxu0 0.0
    %104 = vmatprep.subr.mxu0 0.0
    %105 = vmatpush1.msra.mxu0 0.0
    %106 = vmatprep.subr.mxu0 0.0
    %107 = vmatpush1.msra.mxu0 0.0
    %108 = vmatprep.subr.mxu0 0.0
    %109 = vmatpush1.msra.mxu0 0.0
    %110 = vmatprep.subr.mxu0 0.0
    %111 = vmatpush1.msra.mxu0 0.0
    %112 = vmatprep.subr.mxu0 0.0
    %113 = vmatpush1.msra.mxu0 0.0
    %114 = vmatprep.mubr.f32.mxu0 0.0
    %115 = vmatmul.mubr.f32.gmra.mrb[0].mxu0 %v48
    %v116 = vpop.f32.mrb[0].mxu0
    %v117 = vadd.f32 0.0, %v116
    %v118 = vpop.f32.mrb[0].mxu0
    %119 = vdwg.mxu0
    %v121 = vsel %vm46, %v41, 0
    %123 = vmatprep.subr.mxu0 0.0
    %124 = vmatpush1.msra.mxu0 %v44
    %125 = vmatprep.subr.mxu0 0.0
    %126 = vmatpush1.msra.mxu0 %v45
    %127 = vmatprep.subr.mxu0 0.0
    %128 = vmatpush1.msra.mxu0 0.0
    %129 = vmatprep.subr.mxu0 0.0
    %130 = vmatpush1.msra.mxu0 0.0
    %131 = vmatprep.subr.mxu0 0.0
    %132 = vmatpush1.msra.mxu0 0.0
    %133 = vmatprep.subr.mxu0 0.0
    %134 = vmatpush1.msra.mxu0 0.0
    %135 = vmatprep.subr.mxu0 0.0
    %136 = vmatpush1.msra.mxu0 0.0
    %137 = vmatprep.subr.mxu0 0.0
    %138 = vmatpush1.msra.mxu0 0.0
    %139 = vmatprep.subr.mxu0 0.0
    %140 = vmatpush1.msra.mxu0 0.0
    %141 = vmatprep.subr.mxu0 0.0
    %142 = vmatpush1.msra.mxu0 0.0
    %143 = vmatprep.subr.mxu0 0.0
    %144 = vmatpush1.msra.mxu0 0.0
    %145 = vmatprep.subr.mxu0 0.0
    %146 = vmatpush1.msra.mxu0 0.0
    %147 = vmatprep.subr.mxu0 0.0
    %148 = vmatpush1.msra.mxu0 0.0
    %149 = vmatprep.subr.mxu0 0.0
    %150 = vmatpush1.msra.mxu0 0.0
    %151 = vmatprep.subr.mxu0 0.0
    %152 = vmatpush1.msra.mxu0 0.0
    %153 = vmatprep.subr.mxu0 0.0
    %154 = vmatpush1.msra.mxu0 0.0
    %155 = vmatprep.subr.mxu0 0.0
    %156 = vmatpush1.msra.mxu0 0.0
    %157 = vmatprep.subr.mxu0 0.0
    %158 = vmatpush1.msra.mxu0 0.0
    %159 = vmatprep.subr.mxu0 0.0
    %160 = vmatpush1.msra.mxu0 0.0
    %161 = vmatprep.subr.mxu0 0.0
    %162 = vmatpush1.msra.mxu0 0.0
    %163 = vmatprep.subr.mxu0 0.0
    %164 = vmatpush1.msra.mxu0 0.0
    %165 = vmatprep.subr.mxu0 0.0
    %166 = vmatpush1.msra.mxu0 0.0
    %167 = vmatprep.subr.mxu0 0.0
    %168 = vmatpush1.msra.mxu0 0.0
    %169 = vmatprep.subr.mxu0 0.0
    %170 = vmatpush1.msra.mxu0 0.0
    %171 = vmatprep.subr.mxu0 0.0
    %172 = vmatpush1.msra.mxu0 0.0
    %173 = vmatprep.subr.mxu0 0.0
    %174 = vmatpush1.msra.mxu0 0.0
    %175 = vmatprep.subr.mxu0 0.0
    %176 = vmatpush1.msra.mxu0 0.0
    %177 = vmatprep.subr.mxu0 0.0
    %178 = vmatpush1.msra.mxu0 0.0
    %179 = vmatprep.subr.mxu0 0.0
    %180 = vmatpush1.msra.mxu0 0.0
    %181 = vmatprep.subr.mxu0 0.0
    %182 = vmatpush1.msra.mxu0 0.0
    %183 = vmatprep.subr.mxu0 0.0
    %184 = vmatpush1.msra.mxu0 0.0
    %185 = vmatprep.subr.mxu0 0.0
    %186 = vmatpush1.msra.mxu0 0.0
    %187 = vmatprep.mubr.f32.mxu0 0.0
    %188 = vmatmul.mubr.f32.gmra.mrb[0].mxu0 %v121
    %v189 = vpop.f32.mrb[0].mxu0
    %v190 = vadd.f32 0.0, %v189
    %v191 = vpop.f32.mrb[0].mxu0
    %192 = vdwg.mxu0
    %193 = vst [vmem:[#allocation5] sm:$0xff] %v117
    %194 = vst [vmem:[#allocation5 + $0x8] sm:$0xff] %v190
    // Predicated region
    $region14: #{tpu_custom_call.1} parent=1 // pred_check
      _
    $region15: #{tpu_custom_call.1} parent=1 // pred_check_branch
      %196 = sbr.rel (0) target = $region17
    $region16: #{tpu_custom_call.1} parent=1 // pred_region
      %s198 = ssub.s32 256, 256
      %199 = vsyncadd [#allocation4], %s198
      %s200 = sshll.u32 [#allocation5], 4
      %s201 = int_to_ptr.vmem [resolvable:$true] %s200
      %206 = dma.vmem_to_hbm [thread:$0]  %s201, 256, %s2, [#allocation4], 128, 128, 8
    $region17: #{tpu_custom_call.1} parent=1 // pred_fallthru
      _
    // Predicated region
    $region18: #{tpu_custom_call.1} parent=1 // pred_check
      _
    $region19: #{tpu_custom_call.1} parent=1 // pred_check_branch
      %208 = sbr.rel (0) target = $region21
    $region20: #{tpu_custom_call.1} parent=1 // pred_region
      %209 = dma.done [#allocation4], 256
    $region21: #{tpu_custom_call.1} parent=1 // pred_fallthru
      _
    %210 = vsyncpa [#allocation3], 1
    %211 = vsyncpa [#allocation4], 1

</llo_original>
